<compile_context>
chip_gen: v7x
topology: tpu7x:2x2x1
jax: 0.10.0
libtpu: 0.0.40
codegen_flags: <defaults>
</compile_context>

<pallas_src>
import functools

import jax
import jax.numpy as jnp
from jax import lax
from jax.experimental import pallas as pl
from jax.experimental.pallas import tpu as pltpu


# ----------------------------- forward kernel ------------------------------
def _revin_fwd_kernel(x_ref, gamma_ref, beta_ref, out_ref, stats_ref, *, eps):
    # x_ref:     (1, N, TV)   -- V (variates) on lanes, N (time) on sublanes
    # gamma_ref: (1, 1, TV), beta_ref: (1, 1, TV)
    # out_ref:   (1, N, TV)
    # stats_ref: (1, 2, TV)   -- row 0 = mean, row 1 = var (unbiased=False)
    x = x_ref[...].astype(jnp.float32)            # no-op for f32 inputs
    mean = jnp.mean(x, axis=1, keepdims=True)     # (1, 1, TV) sublane reduce
    xc = x - mean
    var = jnp.mean(xc * xc, axis=1, keepdims=True)

    var_rsqrt = lax.rsqrt(jnp.maximum(var, eps))  # EUP
    g = gamma_ref[...].astype(jnp.float32)        # (1, 1, TV)
    b = beta_ref[...].astype(jnp.float32)

    # Fold gamma into the per-variate scale: one mul + one add per element.
    out_ref[...] = (xc * (var_rsqrt * g) + b).astype(out_ref.dtype)

    stats_ref[:, 0:1, :] = mean.astype(stats_ref.dtype)
    stats_ref[:, 1:2, :] = var.astype(stats_ref.dtype)


# ----------------------------- reverse kernel ------------------------------
def _revin_rev_kernel(y_ref, gamma_ref, beta_ref, stats_ref, out_ref, *, eps):
    # y_ref: (1, N, TV); stats_ref: (1, 2, TV)
    y = y_ref[...].astype(jnp.float32)
    g = gamma_ref[...].astype(jnp.float32)                   # (1, 1, TV)
    b = beta_ref[...].astype(jnp.float32)
    stats = stats_ref[...].astype(jnp.float32)
    mean = stats[:, 0:1, :]                                  # (1, 1, TV)
    var = stats[:, 1:2, :]

    # Per-variate scale/shift on tiny tensors (divide + sqrt never touch the
    # full block):  out = (y - beta)/clamped_gamma * sqrt(var) + mean
    #                   = y * scale + (mean - beta * scale)
    clamped_g = jnp.sign(g) * jnp.maximum(jnp.abs(g), eps)
    scale = jnp.sqrt(var) / clamped_g                        # (1, 1, TV)
    shift = mean - b * scale
    out_ref[...] = (y * scale + shift).astype(out_ref.dtype)


# ------------------------------- tiling helper -------------------------------
def _pick_v_tile(N, V, itemsize=4, target_bytes=4 * 1024 * 1024):
    """Lane-tile of V.  Full V when the (N, V) block fits comfortably;
    otherwise the largest 128-multiple divisor of V keeping the input block
    under `target_bytes` (so double-buffered in+out blocks sit well inside the
    scoped VMEM limit on every generation, incl. v7x's 64 MiB)."""
    if N * V * itemsize <= target_bytes or V % 128 != 0:
        return V
    tv = V
    while tv % 256 == 0 and N * tv * itemsize > target_bytes:
        tv //= 2
    return tv


# ------------------------------- wrappers -----------------------------------
def revin_forward(x, gamma, beta, eps=1e-5):
    """x: (B, N, V).  gamma/beta: (V, 1) like the PyTorch parameters.
    Returns (rescaled (B, N, V), reverse_fn)."""
    B, N, V = x.shape
    assert gamma.shape == (V, 1) and beta.shape == (V, 1)

    # Lane-major parameter vectors (tiny reshape, no HBM round-trip of x).
    g = gamma.reshape(1, 1, V)
    b = beta.reshape(1, 1, V)

    TV = _pick_v_tile(N, V)
    num_v = pl.cdiv(V, TV)
    vmem_cap = 32 * 1024 * 1024  # explicit; safe on v5e/v6e/v7x

    fwd = pl.pallas_call(
        functools.partial(_revin_fwd_kernel, eps=eps),
        out_shape=(
            jax.ShapeDtypeStruct((B, N, V), x.dtype),        # rescaled
            jax.ShapeDtypeStruct((B, 2, V), jnp.float32),    # [mean; var], lane-dense
        ),
        grid_spec=pltpu.PrefetchScalarGridSpec(
            num_scalar_prefetch=0,
            grid=(B, num_v),
            in_specs=[
                pl.BlockSpec((1, N, TV), lambda i, j: (i, 0, j)),
                pl.BlockSpec((1, 1, TV), lambda i, j: (0, 0, j)),
                pl.BlockSpec((1, 1, TV), lambda i, j: (0, 0, j)),
            ],
            out_specs=[
                pl.BlockSpec((1, N, TV), lambda i, j: (i, 0, j)),
                pl.BlockSpec((1, 2, TV), lambda i, j: (i, 0, j)),
            ],
        ),
        compiler_params=pltpu.CompilerParams(
            dimension_semantics=("parallel", "parallel"),
            vmem_limit_bytes=vmem_cap,
        ),
    )
    rescaled, stats = fwd(x, g, b)

    def reverse_fn(scaled_output):
        rev = pl.pallas_call(
            functools.partial(_revin_rev_kernel, eps=eps),
            out_shape=jax.ShapeDtypeStruct((B, N, V), scaled_output.dtype),
            grid_spec=pltpu.PrefetchScalarGridSpec(
                num_scalar_prefetch=0,
                grid=(B, num_v),
                in_specs=[
                    pl.BlockSpec((1, N, TV), lambda i, j: (i, 0, j)),
                    pl.BlockSpec((1, 1, TV), lambda i, j: (0, 0, j)),
                    pl.BlockSpec((1, 1, TV), lambda i, j: (0, 0, j)),
                    pl.BlockSpec((1, 2, TV), lambda i, j: (i, 0, j)),
                ],
                out_specs=pl.BlockSpec((1, N, TV), lambda i, j: (i, 0, j)),
            ),
            compiler_params=pltpu.CompilerParams(
                dimension_semantics=("parallel", "parallel"),
                vmem_limit_bytes=vmem_cap,
            ),
        )
        return rev(scaled_output, g, b, stats)

    return rescaled, reverse_fn


# ----------------------------- pure-JAX reference ---------------------------
def revin_forward_ref(x_bnv, gamma, beta, eps=1e-5):
    # Mirrors the PyTorch module ('b n v -> b v n', stats over time).
    xt = jnp.swapaxes(x_bnv, 1, 2).astype(jnp.float32)        # (B, V, N)
    mean = jnp.mean(xt, axis=-1, keepdims=True)
    var = jnp.mean((xt - mean) ** 2, axis=-1, keepdims=True)  # unbiased=False
    var_rsqrt = lax.rsqrt(jnp.maximum(var, eps))
    rescaled = (xt - mean) * var_rsqrt * gamma + beta
    return jnp.swapaxes(rescaled, 1, 2), mean, var


if __name__ == "__main__":
    # Small shapes consistent with the module: batch=2, seq n=8, variates v=4.
    B, N, V = 2, 8, 4
    eps = 1e-5

    key = jax.random.PRNGKey(0)
    x = jax.random.normal(key, (B, N, V), dtype=jnp.float32)

    # Deterministic params matching nn.Parameter(torch.ones/zeros(V, 1)).
    gamma = jnp.ones((V, 1), dtype=jnp.float32)
    beta = jnp.zeros((V, 1), dtype=jnp.float32)

    rescaled, reverse_fn = revin_forward(x, gamma, beta, eps=eps)
    rescaled = jax.block_until_ready(rescaled)

    # Forward check against pure-JAX reference.
    ref_rescaled, ref_mean, ref_var = revin_forward_ref(x, gamma, beta, eps=eps)
    assert jnp.allclose(rescaled, ref_rescaled, atol=1e-5, rtol=1e-5)

    # Round-trip check: reverse_fn(forward(x)) == x (var >> eps here).
    recon = jax.block_until_ready(reverse_fn(rescaled))
    assert jnp.allclose(recon, x, atol=1e-4, rtol=1e-4)

    print("KERNEL_OK")
</pallas_src>

<mosaic_0001>
module attributes {stable_mosaic.version = 11 : i64} {
  func.func @_revin_fwd_kernel(%arg0: i32, %arg1: i32, %arg2: memref<1x8x4xf32, #tpu.memory_space<vmem>>, %arg3: memref<1x1x4xf32, #tpu.memory_space<vmem>>, %arg4: memref<1x1x4xf32, #tpu.memory_space<vmem>>, %arg5: memref<1x8x4xf32, #tpu.memory_space<vmem>>, %arg6: memref<1x2x4xf32, #tpu.memory_space<vmem>>) attributes {dimension_semantics = [#tpu.dimension_semantics<parallel>, #tpu.dimension_semantics<parallel>], iteration_bounds = array<i64: 2, 1>, scalar_prefetch = 0 : i64, scratch_operands = 0 : i64, tpu.core_type = #tpu.core_type<tc>, window_params = [{transform_indices = @transform_0, window_bounds = array<i64: 1, 8, 4>}, {transform_indices = @transform_1, window_bounds = array<i64: 1, 1, 4>}, {transform_indices = @transform_2, window_bounds = array<i64: 1, 1, 4>}, {transform_indices = @transform_3, window_bounds = array<i64: 1, 8, 4>}, {transform_indices = @transform_4, window_bounds = array<i64: 1, 2, 4>}]} {
    %c0 = arith.constant 0 : index
    %c0_0 = arith.constant 0 : index
    %c0_1 = arith.constant 0 : index
    %0 = vector.load %arg2[%c0, %c0_0, %c0_1] : memref<1x8x4xf32, #tpu.memory_space<vmem>>, vector<1x8x4xf32>
    %cst = arith.constant dense<0.000000e+00> : vector<1x4xf32>
    %1 = vector.multi_reduction <add>, %0, %cst [1] : vector<1x8x4xf32> to vector<1x4xf32>
    %2 = vector.shape_cast %1 : vector<1x4xf32> to vector<1x1x4xf32>
    %cst_2 = arith.constant 8.000000e+00 : f32
    %3 = vector.broadcast %cst_2 : f32 to vector<1x1x4xf32>
    %4 = arith.divf %2, %3 : vector<1x1x4xf32>
    %5 = vector.broadcast %4 : vector<1x1x4xf32> to vector<1x8x4xf32>
    %6 = arith.subf %0, %5 : vector<1x8x4xf32>
    %7 = arith.mulf %6, %6 : vector<1x8x4xf32>
    %cst_3 = arith.constant dense<0.000000e+00> : vector<1x4xf32>
    %8 = vector.multi_reduction <add>, %7, %cst_3 [1] : vector<1x8x4xf32> to vector<1x4xf32>
    %9 = vector.shape_cast %8 : vector<1x4xf32> to vector<1x1x4xf32>
    %cst_4 = arith.constant 8.000000e+00 : f32
    %10 = vector.broadcast %cst_4 : f32 to vector<1x1x4xf32>
    %11 = arith.divf %9, %10 : vector<1x1x4xf32>
    %cst_5 = arith.constant 9.99999974E-6 : f32
    %12 = vector.broadcast %cst_5 : f32 to vector<1x1x4xf32>
    %13 = arith.maximumf %11, %12 : vector<1x1x4xf32>
    %14 = math.rsqrt %13 : vector<1x1x4xf32>
    %c0_6 = arith.constant 0 : index
    %c0_7 = arith.constant 0 : index
    %c0_8 = arith.constant 0 : index
    %15 = vector.load %arg3[%c0_6, %c0_7, %c0_8] : memref<1x1x4xf32, #tpu.memory_space<vmem>>, vector<1x1x4xf32>
    %c0_9 = arith.constant 0 : index
    %c0_10 = arith.constant 0 : index
    %c0_11 = arith.constant 0 : index
    %16 = vector.load %arg4[%c0_9, %c0_10, %c0_11] : memref<1x1x4xf32, #tpu.memory_space<vmem>>, vector<1x1x4xf32>
    %17 = arith.mulf %14, %15 : vector<1x1x4xf32>
    %18 = vector.broadcast %17 : vector<1x1x4xf32> to vector<1x8x4xf32>
    %19 = arith.mulf %6, %18 : vector<1x8x4xf32>
    %20 = vector.broadcast %16 : vector<1x1x4xf32> to vector<1x8x4xf32>
    %21 = arith.addf %19, %20 : vector<1x8x4xf32>
    %c0_12 = arith.constant 0 : index
    %c0_13 = arith.constant 0 : index
    %c0_14 = arith.constant 0 : index
    %22 = vector.load %arg5[%c0_12, %c0_13, %c0_14] : memref<1x8x4xf32, #tpu.memory_space<vmem>>, vector<1x8x4xf32>
    tpu.vector_store %arg5[%c0_12, %c0_13, %c0_14], %21 {strides = array<i32>} : memref<1x8x4xf32, #tpu.memory_space<vmem>>, vector<1x8x4xf32>,
    %c0_15 = arith.constant 0 : index
    %c0_16 = arith.constant 0 : index
    %c0_17 = arith.constant 0 : index
    %23 = vector.load %arg6[%c0_15, %c0_16, %c0_17] : memref<1x2x4xf32, #tpu.memory_space<vmem>>, vector<1x1x4xf32>
    tpu.vector_store %arg6[%c0_15, %c0_16, %c0_17], %4 {strides = array<i32>} : memref<1x2x4xf32, #tpu.memory_space<vmem>>, vector<1x1x4xf32>,
    %c0_18 = arith.constant 0 : index
    %c1 = arith.constant 1 : index
    %c0_19 = arith.constant 0 : index
    %24 = vector.load %arg6[%c0_18, %c1, %c0_19] : memref<1x2x4xf32, #tpu.memory_space<vmem>>, vector<1x1x4xf32>
    tpu.vector_store %arg6[%c0_18, %c1, %c0_19], %11 {strides = array<i32>} : memref<1x2x4xf32, #tpu.memory_space<vmem>>, vector<1x1x4xf32>,
    return
  }
  func.func @transform_0(%arg0: i32, %arg1: i32) -> (i32, i32, i32) {
    %c0_i32 = arith.constant 0 : i32
    %c0_i32_0 = arith.constant 0 : i32
    return %arg0, %c0_i32, %arg1 : i32, i32, i32
  }
  func.func @transform_1(%arg0: i32, %arg1: i32) -> (i32, i32, i32) {
    %c0_i32 = arith.constant 0 : i32
    %c0_i32_0 = arith.constant 0 : i32
    %c0_i32_1 = arith.constant 0 : i32
    return %c0_i32, %c0_i32_0, %arg1 : i32, i32, i32
  }
  func.func @transform_2(%arg0: i32, %arg1: i32) -> (i32, i32, i32) {
    %c0_i32 = arith.constant 0 : i32
    %c0_i32_0 = arith.constant 0 : i32
    %c0_i32_1 = arith.constant 0 : i32
    return %c0_i32, %c0_i32_0, %arg1 : i32, i32, i32
  }
  func.func @transform_3(%arg0: i32, %arg1: i32) -> (i32, i32, i32) {
    %c0_i32 = arith.constant 0 : i32
    %c0_i32_0 = arith.constant 0 : i32
    return %arg0, %c0_i32, %arg1 : i32, i32, i32
  }
  func.func @transform_4(%arg0: i32, %arg1: i32) -> (i32, i32, i32) {
    %c0_i32 = arith.constant 0 : i32
    %c0_i32_0 = arith.constant 0 : i32
    return %arg0, %c0_i32, %arg1 : i32, i32, i32
  }
}

</mosaic_0001>

<llo_original>
// kernel: tpu_custom_call.1
$region0: #{tpu_custom_call.1}
  #allocation0 [shape = 'u32[]', space=smem, size = 0x4, offset = 0x4, fixed_abs, tag = 'smem constant byte address 0x4 - core index']
  #allocation1 [shape = 'u32[144,128]{1,0:T(1,128)}', space=vmem, size = 0x12000, scoped, tag = 'internal scratch']
  %s0 = inlined_call_operand.vmem [shape: f32[2,8,4], index: 0, kind: input, shape index: {}]
  %s1 = inlined_call_operand.vmem [shape: f32[1,1,4], index: 1, kind: input, shape index: {}]
  %s2 = inlined_call_operand.vmem [shape: f32[1,1,4], index: 2, kind: input, shape index: {}]
  %s3 = inlined_call_operand.vmem [shape: f32[2,8,4], index: 3, kind: output, shape index: {0}]
  %s4 = inlined_call_operand.hbm [shape: f32[2,2,4], index: 4, kind: output, shape index: {1}]
  %5 = xla_tuple %s3, %s4
  %s6 = sld [smem:[#allocation0]]
  $region53: #{tpu_custom_call.1} parent=0
    _
  %s8 = ssub.s32 1, %s6
  %s9 = scalar_select 0, %s8, %s6
  $region1: #{tpu_custom_call.1} parent=0
    #allocation2 [shape = 'u8[2048]{0}', space=vmem, size = 0x800, scoped, tag = 'output window, operand 1']
    #allocation3 [shape = 's32[2]{0}', space=sflag, size = 0x8, scoped, tag = 'scoped memory for tpu_custom_call.1']
    %10 = vsyncpa [#allocation3], 0
    %s11 = scalar_lea.sflag [#allocation3], 1
    %12 = vsyncpa %s11, 0
    loop: start=0, step=1, limit=4
    $region2: #{tpu_custom_call.1} parent=1 // loop_pre_header
      _
    $region3: #{tpu_custom_call.1} parent=1 // loop_header
      %s14 = sphi 0, %s18
      %p15 = scmp.ge.s32.totalorder %s14, 4
      %s21 = sphi 0, %s33
      %s22 = sphi 0, %s29
      %s23 = sphi 0, %s21
      %s24 = sphi 0, %s22
      %s25 = sphi 0, %s23
      %s26 = sphi 0, %s24
      %s38 = sphi 0, %s40
      %s41 = sphi 0, %s38
      %s42 = sphi 0, %s41
      %s58 = sphi 0, %s42
      %s64 = sphi 0, %s66
      %s67 = sphi 0, %s64
      %s68 = sphi 0, %s67
      %s84 = sphi 0, %s68
      %s90 = sphi 0, %s92
      %s93 = sphi 0, %s90
      %s94 = sphi 0, %s93
      %s110 = sphi 0, %s94
      %s118 = sphi 0, %s120
      %s121 = sphi 0, %s118
      %s122 = sphi 0, %s121
      %s138 = sphi 0, %s122
      %s146 = sphi 0, %s148
      %s149 = sphi 0, %s146
      %s150 = sphi 0, %s149
      %s166 = sphi 0, %s150
    $region4: #{tpu_custom_call.1} parent=1 // loop_header_branch
      %17 = sbr.rel (%p15) target = $region8
    $region5: #{tpu_custom_call.1} parent=1 // loop_body
      %s19 = ssub.s32 %s14, 1
      %s20 = ssub.s32 %s14, 2
      %s27 = sadd.s32 1, %s22
      %p28 = scmp.ge.s32.totalorder %s27, 1
      %s29 = scalar_select %p28, 0, %s27
      %s30 = sadd.s32 1, %s21
      %s31 = scalar_select %p28, %s30, %s21
      %p32 = scmp.ge.s32.totalorder %s31, 2
      %s33 = scalar_select %p32, 0, %s31
      %s34 = ssub.s32 %s21, %s33
      %s35 = ssub.s32 %s22, %s29
      %s36 = sor.u32 %s34, %s35
      %p37 = scmp.eq.s32.totalorder %s36, 0
      %s39 = sadd.s32 %s38, 1
      %s40 = scalar_select %p37, %s38, %s39
      %p43 = pneg %p37
      %p44 = scmp.eq.s32.totalorder %s14, 1
      %p45 = por %p43, %p44
      %p46 = scmp.ne.s32.totalorder %s38, %s41
      %p47 = scmp.eq.s32.totalorder %s14, 0
      %p48 = por %p46, %p47
      %p49 = scmp.ne.s32.totalorder %s38, %s41
      %p50 = scmp.eq.s32.totalorder %s19, 1
      %p51 = por %p49, %p50
      %p52 = scmp.ne.s32.totalorder %s41, %s42
      %p53 = scmp.eq.s32.totalorder %s19, 0
      %p54 = por %p52, %p53
      %p55 = scmp.ne.s32.totalorder %s41, %s42
      %p56 = scmp.eq.s32.totalorder %s20, 1
      %p57 = por %p55, %p56
      %p59 = scmp.ne.s32.totalorder %s42, %s58
      %p60 = scmp.eq.s32.totalorder %s20, 0
      %p61 = por %p59, %p60
      %s62 = ssub.s32 %s22, %s29
      %p63 = scmp.eq.s32.totalorder %s62, 0
      %s65 = sadd.s32 %s64, 1
      %s66 = scalar_select %p63, %s64, %s65
      %p69 = pneg %p63
      %p70 = scmp.eq.s32.totalorder %s14, 1
      %p71 = por %p69, %p70
      %p72 = scmp.ne.s32.totalorder %s64, %s67
      %p73 = scmp.eq.s32.totalorder %s14, 0
      %p74 = por %p72, %p73
      %p75 = scmp.ne.s32.totalorder %s64, %s67
      %p76 = scmp.eq.s32.totalorder %s19, 1
      %p77 = por %p75, %p76
      %p78 = scmp.ne.s32.totalorder %s67, %s68
      %p79 = scmp.eq.s32.totalorder %s19, 0
      %p80 = por %p78, %p79
      %p81 = scmp.ne.s32.totalorder %s67, %s68
      %p82 = scmp.eq.s32.totalorder %s20, 1
      %p83 = por %p81, %p82
      %p85 = scmp.ne.s32.totalorder %s68, %s84
      %p86 = scmp.eq.s32.totalorder %s20, 0
      %p87 = por %p85, %p86
      %s88 = ssub.s32 %s22, %s29
      %p89 = scmp.eq.s32.totalorder %s88, 0
      %s91 = sadd.s32 %s90, 1
      %s92 = scalar_select %p89, %s90, %s91
      %p95 = pneg %p89
      %p96 = scmp.eq.s32.totalorder %s14, 1
      %p97 = por %p95, %p96
      %p98 = scmp.ne.s32.totalorder %s90, %s93
      %p99 = scmp.eq.s32.totalorder %s14, 0
      %p100 = por %p98, %p99
      %p101 = scmp.ne.s32.totalorder %s90, %s93
      %p102 = scmp.eq.s32.totalorder %s19, 1
      %p103 = por %p101, %p102
      %p104 = scmp.ne.s32.totalorder %s93, %s94
      %p105 = scmp.eq.s32.totalorder %s19, 0
      %p106 = por %p104, %p105
      %p107 = scmp.ne.s32.totalorder %s93, %s94
      %p108 = scmp.eq.s32.totalorder %s20, 1
      %p109 = por %p107, %p108
      %p111 = scmp.ne.s32.totalorder %s94, %s110
      %p112 = scmp.eq.s32.totalorder %s20, 0
      %p113 = por %p111, %p112
      %s114 = ssub.s32 %s21, %s33
      %s115 = ssub.s32 %s22, %s29
      %s116 = sor.u32 %s114, %s115
      %p117 = scmp.eq.s32.totalorder %s116, 0
      %s119 = sadd.s32 %s118, 1
      %s120 = scalar_select %p117, %s118, %s119
      %p123 = pneg %p117
      %p124 = scmp.eq.s32.totalorder %s14, 1
      %p125 = por %p123, %p124
      %p126 = scmp.ne.s32.totalorder %s118, %s121
      %p127 = scmp.eq.s32.totalorder %s14, 0
      %p128 = por %p126, %p127
      %p129 = scmp.ne.s32.totalorder %s118, %s121
      %p130 = scmp.eq.s32.totalorder %s19, 1
      %p131 = por %p129, %p130
      %p132 = scmp.ne.s32.totalorder %s121, %s122
      %p133 = scmp.eq.s32.totalorder %s19, 0
      %p134 = por %p132, %p133
      %p135 = scmp.ne.s32.totalorder %s121, %s122
      %p136 = scmp.eq.s32.totalorder %s20, 1
      %p137 = por %p135, %p136
      %p139 = scmp.ne.s32.totalorder %s122, %s138
      %p140 = scmp.eq.s32.totalorder %s20, 0
      %p141 = por %p139, %p140
      %s142 = ssub.s32 %s21, %s33
      %s143 = ssub.s32 %s22, %s29
      %s144 = sor.u32 %s142, %s143
      %p145 = scmp.eq.s32.totalorder %s144, 0
      %s147 = sadd.s32 %s146, 1
      %s148 = scalar_select %p145, %s146, %s147
      %p151 = pneg %p145
      %p152 = scmp.eq.s32.totalorder %s14, 1
      %p153 = por %p151, %p152
      %p154 = scmp.ne.s32.totalorder %s146, %s149
      %p155 = scmp.eq.s32.totalorder %s14, 0
      %p156 = por %p154, %p155
      %p157 = scmp.ne.s32.totalorder %s146, %s149
      %p158 = scmp.eq.s32.totalorder %s19, 1
      %p159 = por %p157, %p158
      %p160 = scmp.ne.s32.totalorder %s149, %s150
      %p161 = scmp.eq.s32.totalorder %s19, 0
      %p162 = por %p160, %p161
      %p163 = scmp.ne.s32.totalorder %s149, %s150
      %p164 = scmp.eq.s32.totalorder %s20, 1
      %p165 = por %p163, %p164
      %p167 = scmp.ne.s32.totalorder %s150, %s166
      %p168 = scmp.eq.s32.totalorder %s20, 0
      %p169 = por %p167, %p168
      %p170 = scmp.le.s32.totalorder 1, %s14
      %p171 = scmp.lt.s32.totalorder %s14, 3
      %p172 = pnand %p170, %p171
      %p173 = pneg %p172
      // Predicated region
      $region9: #{tpu_custom_call.1} parent=5 // pred_check
        _
      $region10: #{tpu_custom_call.1} parent=5 // pred_check_branch
        %175 = sbr.rel (%p172) target = $region12
      $region11: #{tpu_custom_call.1} parent=5 // pred_region
        %s176 = ssub.s32 %s14, 1
        // Predicated region
        $region13: #{tpu_custom_call.1} parent=11 // pred_check
          %p177 = pneg %p80
        $region14: #{tpu_custom_call.1} parent=11 // pred_check_branch
          %179 = sbr.rel (%p177) target = $region16
        $region15: #{tpu_custom_call.1} parent=11 // pred_region
          %p180 = scmp.lt.s32.totalorder %s24, 0
          %s181 = scalar_select %p180, %s24, 0
          %s182 = scalar_lea.vmem %s1, %s181
        $region16: #{tpu_custom_call.1} parent=11 // pred_fallthru
          _
        // Predicated region
        $region17: #{tpu_custom_call.1} parent=11 // pred_check
          %p183 = pneg %p106
        $region18: #{tpu_custom_call.1} parent=11 // pred_check_branch
          %185 = sbr.rel (%p183) target = $region20
        $region19: #{tpu_custom_call.1} parent=11 // pred_region
          %p186 = scmp.lt.s32.totalorder %s24, 0
          %s187 = scalar_select %p186, %s24, 0
          %s188 = scalar_lea.vmem %s2, %s187
        $region20: #{tpu_custom_call.1} parent=11 // pred_fallthru
          _
      $region12: #{tpu_custom_call.1} parent=5 // pred_fallthru
        _
      %p189 = scmp.lt.s32.totalorder %s14, 2
      // Predicated region
      $region21: #{tpu_custom_call.1} parent=5 // pred_check
        %p190 = pneg %p189
      $region22: #{tpu_custom_call.1} parent=5 // pred_check_branch
        %192 = sbr.rel (%p190) target = $region24
      $region23: #{tpu_custom_call.1} parent=5 // pred_region
        // Predicated region
        $region25: #{tpu_custom_call.1} parent=23 // pred_check
          %p193 = pneg %p48
        $region26: #{tpu_custom_call.1} parent=23 // pred_check_branch
          %195 = sbr.rel (%p193) target = $region28
        $region27: #{tpu_custom_call.1} parent=23 // pred_region
          %p196 = scmp.lt.s32.totalorder %s21, 1
          %s197 = scalar_select %p196, %s21, 1
          %p198 = scmp.lt.s32.totalorder %s22, 0
          %s199 = scalar_select %p198, %s22, 0
          %s200 = sadd.s32 %s199, %s197
          %s201 = smul.addr %s200, 8
          %s202 = scalar_lea.vmem %s0, %s201
        $region28: #{tpu_custom_call.1} parent=23 // pred_fallthru
          _
      $region24: #{tpu_custom_call.1} parent=5 // pred_fallthru
        _
      %p203 = scmp.le.s32.totalorder 1, %s14
      %p204 = scmp.lt.s32.totalorder %s14, 3
      %p205 = pnand %p203, %p204
      %p206 = pneg %p205
      // Predicated region
      $region29: #{tpu_custom_call.1} parent=5 // pred_check
        _
      $region30: #{tpu_custom_call.1} parent=5 // pred_check_branch
        %208 = sbr.rel (%p205) target = $region32
      $region31: #{tpu_custom_call.1} parent=5 // pred_region
        %s209 = ssub.s32 %s14, 1
        %p210 = scmp.lt.s32.totalorder %s23, 1
        %s211 = scalar_select %p210, %s23, 1
        %p212 = scmp.lt.s32.totalorder %s24, 0
        %s213 = scalar_select %p212, %s24, 0
        %s214 = sadd.s32 %s213, %s211
        %s215 = smul.addr %s214, 8
        %s216 = scalar_lea.vmem %s0, %s215
        %p217 = pneg %p54
        %p218 = pneg %p51
        %p219 = scmp.lt.s32.totalorder %s24, 0
        %s220 = scalar_select %p219, %s24, 0
        %s221 = scalar_lea.vmem %s1, %s220
        %p222 = pneg %p80
        %p223 = pneg %p77
        %p224 = scmp.lt.s32.totalorder %s24, 0
        %s225 = scalar_select %p224, %s24, 0
        %s226 = scalar_lea.vmem %s2, %s225
        %p227 = pneg %p106
        %p228 = pneg %p103
        %p229 = pneg %p134
        %p230 = pneg %p131
        %p231 = scmp.lt.s32.totalorder %s23, 1
        %s232 = scalar_select %p231, %s23, 1
        %p233 = scmp.lt.s32.totalorder %s24, 0
        %s234 = scalar_select %p233, %s24, 0
        %s235 = sadd.s32 %s234, %s232
        %s236 = smul.addr %s235, 8
        %s237 = scalar_lea.vmem %s3, %s236
        %p238 = pneg %p162
        %p239 = pneg %p159
        %s240 = sand.u32 %s149, 1
        %s241 = scalar_lea.sflag [#allocation3], %s240
        %s242 = sand.u32 %s149, 1
        %s243 = smul.addr %s242, 2
        %s244 = scalar_lea.vmem [#allocation2], %s243
        %p245 = scmp.lt.s32.totalorder %s23, 1
        %s246 = scalar_select %p245, %s23, 1
        %p247 = scmp.lt.s32.totalorder %s24, 0
        %s248 = scalar_select %p247, %s24, 0
        %s249 = sadd.s32 %s248, %s246
        %s250 = smul.addr %s249, 8
        %s251 = scalar_lea.vmem %s0, %s250
        %p252 = scmp.lt.s32.totalorder %s24, 0
        %s253 = scalar_select %p252, %s24, 0
        %s254 = scalar_lea.vmem %s1, %s253
        %p255 = scmp.lt.s32.totalorder %s24, 0
        %s256 = scalar_select %p255, %s24, 0
        %s257 = scalar_lea.vmem %s2, %s256
        %p258 = scmp.lt.s32.totalorder %s23, 1
        %s259 = scalar_select %p258, %s23, 1
        %p260 = scmp.lt.s32.totalorder %s24, 0
        %s261 = scalar_select %p260, %s24, 0
        %s262 = sadd.s32 %s261, %s259
        %s263 = smul.addr %s262, 8
        %s264 = scalar_lea.vmem %s3, %s263
        %v265 = vld [vmem:[%s251] sm:$0xff]
        %vm266 = vcmask 31744
        %v267 = vsel %vm266, %v265, 0.0
        %v268 = vrot.slane %v267, 4
        %v269 = vadd.f32 %v267, %v268
        %v270 = vrot.slane %v269, 2
        %v271 = vadd.f32 %v269, %v270
        %v272 = vrot.slane %v271, 1
        %v273 = vadd.f32 %v271, %v272
        %v274 = vrcp.pop 8.0
        %v275 = vmul.f32 %v273, %v274
        %v276 = vsub.f32 %v265, %v275
        %v277 = vmul.f32 %v276, %v276
        %v278 = vsel %vm266, %v277, 0.0
        %v279 = vrot.slane %v278, 4
        %v280 = vadd.f32 %v278, %v279
        %v281 = vrot.slane %v280, 2
        %v282 = vadd.f32 %v280, %v281
        %v283 = vrot.slane %v282, 1
        %v284 = vadd.f32 %v282, %v283
        %v285 = vmul.f32 %v284, %v274
        %v286 = vmax.f32 %v285, 1e-05
        %v287 = vrsqrt.pop %v286
        %v288 = vld [vmem:[%s254] sm:$0x1]
        %v289 = vld [vmem:[%s257] sm:$0x1]
        %v290 = vmul.f32 %v287, %v288
        %v291 = vlaneseq
        %v292 = vshrl.u32 %v291, 7
        %v293 = vsub.s32 0, %v292
        %v294 = vrot.slane %v290, %v293
        %v295 = vmul.f32 %v276, %v294
        %v297 = vlaneseq
        %v298 = vshrl.u32 %v297, 7
        %v299 = vsub.s32 0, %v298
        %v300 = vrot.slane %v289, %v299
        %v302 = vadd.f32 %v295, %v300
        %303 = vst.msk [vmem:[%s264] sm:$0xff] %vm266, %v302
        %vm304 = vcmask 24576
        %305 = vst.msk [vmem:[%s244] sm:$0x1] %vm304, %v275
        %306 = vst.msk [vmem:[%s244 + $0x1] sm:$0x1] %vm304, %v285
        %p307 = scmp.lt.s32.totalorder %s23, 1
        %s308 = scalar_select %p307, %s23, 1
        %p309 = scmp.lt.s32.totalorder %s24, 0
        %s310 = scalar_select %p309, %s24, 0
        %s311 = sadd.s32 %s310, %s308
        %s312 = smul.addr %s311, 8
        %s313 = scalar_lea.vmem %s3, %s312
        %s314 = sand.u32 %s149, 1
        %s315 = scalar_lea.sflag [#allocation3], %s314
        %s316 = sand.u32 %s149, 1
        %s317 = smul.addr %s316, 2
        %s318 = scalar_lea.vmem [#allocation2], %s317
        // Predicated region
        $region33: #{tpu_custom_call.1} parent=31 // pred_check
          %p319 = pneg %p131
        $region34: #{tpu_custom_call.1} parent=31 // pred_check_branch
          %321 = sbr.rel (%p319) target = $region36
        $region35: #{tpu_custom_call.1} parent=31 // pred_region
          _
        $region36: #{tpu_custom_call.1} parent=31 // pred_fallthru
          _
        // Predicated region
        $region37: #{tpu_custom_call.1} parent=31 // pred_check
          %p322 = pneg %p159
        $region38: #{tpu_custom_call.1} parent=31 // pred_check_branch
          %324 = sbr.rel (%p322) target = $region40
        $region39: #{tpu_custom_call.1} parent=31 // pred_region
          %s326 = ssub.s32 32, 32
          %327 = vsyncadd %s315, %s326
          %s328 = sadd.s32 %s24, %s23
          %s329 = smul.addr %s328, 32
          %s330 = scalar_lea.hbm %s4, %s329
          %s332 = sshll.u32 %s318, 4
          %s333 = int_to_ptr.vmem [resolvable:$true] %s332
          %335 = dma.vmem_to_hbm [thread:$0]  %s333, 32, %s330, %s315
        $region40: #{tpu_custom_call.1} parent=31 // pred_fallthru
          _
      $region32: #{tpu_custom_call.1} parent=5 // pred_fallthru
        _
      %p336 = scmp.le.s32.totalorder 2, %s14
      // Predicated region
      $region41: #{tpu_custom_call.1} parent=5 // pred_check
        %p337 = pneg %p336
      $region42: #{tpu_custom_call.1} parent=5 // pred_check_branch
        %339 = sbr.rel (%p337) target = $region44
      $region43: #{tpu_custom_call.1} parent=5 // pred_region
        %s340 = ssub.s32 %s14, 2
        // Predicated region
        $region45: #{tpu_custom_call.1} parent=43 // pred_check
          %p341 = pneg %p137
        $region46: #{tpu_custom_call.1} parent=43 // pred_check_branch
          %343 = sbr.rel (%p341) target = $region48
        $region47: #{tpu_custom_call.1} parent=43 // pred_region
          %p344 = scmp.lt.s32.totalorder %s25, 1
          %s345 = scalar_select %p344, %s25, 1
          %p346 = scmp.lt.s32.totalorder %s26, 0
          %s347 = scalar_select %p346, %s26, 0
          %s348 = sadd.s32 %s347, %s345
          %s349 = smul.addr %s348, 8
          %s350 = scalar_lea.vmem %s3, %s349
        $region48: #{tpu_custom_call.1} parent=43 // pred_fallthru
          _
        // Predicated region
        $region49: #{tpu_custom_call.1} parent=43 // pred_check
          %p351 = pneg %p165
        $region50: #{tpu_custom_call.1} parent=43 // pred_check_branch
          %353 = sbr.rel (%p351) target = $region52
        $region51: #{tpu_custom_call.1} parent=43 // pred_region
          %s354 = sand.u32 %s150, 1
          %s355 = scalar_lea.sflag [#allocation3], %s354
          %s356 = sand.u32 %s150, 1
          %s357 = smul.addr %s356, 2
          %s358 = scalar_lea.vmem [#allocation2], %s357
          %359 = dma.done %s355, 32
        $region52: #{tpu_custom_call.1} parent=43 // pred_fallthru
          _
      $region44: #{tpu_custom_call.1} parent=5 // pred_fallthru
        _
    $region6: #{tpu_custom_call.1} parent=1 // loop_footer
      %s18 = sadd.s32 1, %s14
    $region7: #{tpu_custom_call.1} parent=1 // loop_footer_branch
      %13 = sbr.rel target = $region3
    $region8: #{tpu_custom_call.1} parent=1 // loop_exit
      _
    %360 = vsyncpa [#allocation3], 1
    %s361 = scalar_lea.sflag [#allocation3], 1
    %362 = vsyncpa %s361, 1

</llo_original>
